<compile_context>
chip_gen: v5e
topology: v5e:2x2
jax: 0.10.0
libtpu: 0.0.40
codegen_flags: <defaults>
</compile_context>

<pallas_src>
import functools

import jax
import jax.numpy as jnp
from jax.experimental import pallas as pl
from jax.experimental.pallas import tpu as pltpu


def _ce_tile_kernel(logits_ref, targets_ref, out_ref, *, num_rows, ignore_index):
    """One grid step: cross-entropy SUM over a tile of rows.

    logits_ref : (TM, V) float  -- tile of flattened logits (any float dtype)
    targets_ref: (TM, 1) int32  -- tile of target token ids
    out_ref    : (1, 1, 1) f32  -- this tile's partial sum
    """
    i = pl.program_id(0)
    tm = logits_ref.shape[0]

    x = logits_ref[...].astype(jnp.float32)            # (TM, V)
    t = targets_ref[...]                                # (TM, 1) int32

    # valid-row mask: rows past the real N (padding) contribute 0; optionally
    # also mask ignore_index tokens (nn.CrossEntropyLoss default behavior).
    row = jax.lax.broadcasted_iota(jnp.int32, (tm, 1), 0) + i * tm
    valid = row < num_rows
    if ignore_index is not None:
        valid = jnp.logical_and(valid, t != ignore_index)

    # numerically stable cross-entropy, reusing centered logits p for both terms:
    #   loss = log(sum exp(p)) - p[target],  p = x - max(x)
    m = jnp.max(x, axis=-1, keepdims=True)              # (TM, 1)
    p = x - m                                            # (TM, V)
    lse = jnp.log(jnp.sum(jnp.exp(p), axis=-1, keepdims=True))   # (TM, 1)

    # gather p at target index via one-hot select (no dynamic gather on TPU)
    col = jax.lax.broadcasted_iota(jnp.int32, p.shape, 1)
    tgt_p = jnp.sum(jnp.where(col == t, p, 0.0), axis=-1, keepdims=True)

    per_row = jnp.where(valid, lse - tgt_p, 0.0)         # (TM, 1)
    tile_sum = jnp.sum(per_row)                          # scalar f32

    out_ref[...] = jnp.full((1, 1, 1), tile_sum, dtype=jnp.float32)


def _pick_row_tile(n_rows, vocab, dtype,
                   *, per_buffer_bytes=16 * 1024 * 1024, max_rows=1024):
    """Largest row tile (multiple of 8) whose single logits buffer fits the budget.

    per_buffer_bytes=16 MiB -> double-buffered logits <= 32 MiB, which fits the
    scoped-VMEM we request on v5e/v6e and v7x's 64 MiB physical VMEM.
    """
    row_bytes = max(1, vocab * jnp.dtype(dtype).itemsize)
    tm = min(max_rows, per_buffer_bytes // row_bytes)
    tm = max(8, (tm // 8) * 8)
    n_pad8 = ((n_rows + 7) // 8) * 8
    return max(8, min(tm, n_pad8))


def _compiler_params(tm, vocab, dtype):
    # double-buffered logits tile + (small) targets / output buffers
    needed = 2 * tm * vocab * jnp.dtype(dtype).itemsize + 4 * tm * 8
    kwargs = dict(dimension_semantics=("parallel",))
    # Only raise scoped VMEM when the pipeline actually needs it (keeps small
    # shapes on the default limit for every TPU generation).
    if needed > 12 * 1024 * 1024:
        kwargs["vmem_limit_bytes"] = 48 * 1024 * 1024
    return pltpu.CompilerParams(**kwargs)


def cross_entropy_mean(outputs, targets, *, row_tile=None, ignore_index=-100):
    """Mean token-level cross entropy computed with a Pallas TPU kernel.

    outputs: [batch, seq_len, vocab] float (f32 or bf16 -- kept in HBM dtype)
    targets: [batch, seq_len] int
    """
    B, S, V = outputs.shape
    N = B * S
    logits = outputs.reshape(N, V)
    tgt = targets.reshape(N).astype(jnp.int32)

    tm = row_tile if row_tile is not None else _pick_row_tile(N, V, logits.dtype)
    num_tiles = pl.cdiv(N, tm)
    n_pad = num_tiles * tm
    if n_pad != N:
        logits = jnp.pad(logits, ((0, n_pad - N), (0, 0)))
        tgt = jnp.pad(tgt, (0, n_pad - N))
    tgt2d = tgt.reshape(n_pad, 1)

    partial_sums = pl.pallas_call(
        functools.partial(_ce_tile_kernel, num_rows=N, ignore_index=ignore_index),
        out_shape=jax.ShapeDtypeStruct((num_tiles, 1, 1), jnp.float32),
        grid_spec=pltpu.PrefetchScalarGridSpec(
            num_scalar_prefetch=0,
            grid=(num_tiles,),
            in_specs=[
                pl.BlockSpec((tm, V), lambda i: (i, 0)),
                pl.BlockSpec((tm, 1), lambda i: (i, 0)),
            ],
            out_specs=pl.BlockSpec((1, 1, 1), lambda i: (i, 0, 0)),
        ),
        compiler_params=_compiler_params(tm, V, logits.dtype),
    )(logits, tgt2d)

    loss_sum = jnp.sum(partial_sums)
    if ignore_index is None:
        denom = jnp.float32(N)
    else:
        denom = jnp.maximum(
            jnp.sum((targets.reshape(-1) != ignore_index).astype(jnp.float32)), 1.0)
    return loss_sum / denom


def validity_aware_loss(outputs, targets, invalid_flags=None,
                        validity_weight=1.0, ignore_index=-100):
    """JAX/Pallas equivalent of ValidityAwareLoss.forward.

    invalid_flags: optional [batch]-length float array of 0/1 "is invalid"
    flags (stands in for the RDKit SMILES check on `predictions`).
    """
    base_loss = cross_entropy_mean(outputs, targets, ignore_index=ignore_index)

    if invalid_flags is not None:
        # TODO(synk): RDKit `Chem.MolFromSmiles` validity checking of generated
        # SMILES strings has no Pallas/JAX equivalent; flags are precomputed host-side.
        batch_size = invalid_flags.shape[0]
        invalid_count = jnp.sum(invalid_flags.astype(jnp.float32))
        validity_penalty = invalid_count / batch_size * 2.0
        total_loss = base_loss + validity_weight * validity_penalty
        stats = {
            "base_loss": base_loss,
            "validity_penalty": validity_penalty,
            "validity_rate": 1.0 - invalid_count / batch_size,
        }
        return total_loss, stats

    return base_loss, {"base_loss": base_loss}


def _reference_ce(outputs, targets):
    """Pure-JAX reference for correctness checking."""
    B, S, V = outputs.shape
    x = outputs.reshape(-1, V).astype(jnp.float32)
    t = targets.reshape(-1)
    lse = jax.scipy.special.logsumexp(x, axis=-1)
    tgt = jnp.take_along_axis(x, t[:, None], axis=-1)[:, 0]
    return jnp.mean(lse - tgt)


if __name__ == "__main__":
    key = jax.random.PRNGKey(0)
    k1, k2, k3 = jax.random.split(key, 3)

    batch, seq, vocab = 2, 8, 32
    outputs = jax.random.normal(k1, (batch, seq, vocab), dtype=jnp.float32)
    targets = jax.random.randint(k2, (batch, seq), 0, vocab, dtype=jnp.int32)
    # synthetic "is invalid" flags standing in for RDKit SMILES validation
    invalid_flags = (jax.random.uniform(k3, (batch,)) < 0.5).astype(jnp.float32)

    total_loss, stats = validity_aware_loss(
        outputs, targets, invalid_flags=invalid_flags, validity_weight=1.0)
    total_loss = jax.block_until_ready(total_loss)

    # sanity check against pure-JAX reference
    ref = _reference_ce(outputs, targets)
    assert jnp.allclose(stats["base_loss"], ref, atol=1e-5, rtol=1e-5), (
        stats["base_loss"], ref)

    print("KERNEL_OK")
</pallas_src>

<mosaic_0001>
module attributes {stable_mosaic.version = 11 : i64} {
  func.func @_ce_tile_kernel(%arg0: i32, %arg1: memref<16x32xf32, #tpu.memory_space<vmem>>, %arg2: memref<16x1xi32, #tpu.memory_space<vmem>>, %arg3: memref<1x1x1xf32, #tpu.memory_space<vmem>>) attributes {dimension_semantics = [#tpu.dimension_semantics<parallel>], iteration_bounds = array<i64: 1>, scalar_prefetch = 0 : i64, scratch_operands = 0 : i64, tpu.core_type = #tpu.core_type<tc>, window_params = [{transform_indices = @transform_0, window_bounds = array<i64: 16, 32>}, {transform_indices = @transform_1, window_bounds = array<i64: 16, 1>}, {transform_indices = @transform_2, window_bounds = array<i64: 1, 1, 1>}]} {
    %c0 = arith.constant 0 : index
    %c0_0 = arith.constant 0 : index
    %0 = vector.load %arg1[%c0, %c0_0] : memref<16x32xf32, #tpu.memory_space<vmem>>, vector<16x32xf32>
    %c0_1 = arith.constant 0 : index
    %c0_2 = arith.constant 0 : index
    %1 = vector.load %arg2[%c0_1, %c0_2] : memref<16x1xi32, #tpu.memory_space<vmem>>, vector<16x1xi32>
    %2 = tpu.iota {dimensions = array<i32: 0>} : vector<16x1xi32>
    %c16_i32 = arith.constant 16 : i32
    %3 = arith.muli %arg0, %c16_i32 : i32
    %4 = vector.broadcast %3 : i32 to vector<16x1xi32>
    %5 = arith.addi %2, %4 : vector<16x1xi32>
    %c16_i32_3 = arith.constant 16 : i32
    %6 = vector.broadcast %c16_i32_3 : i32 to vector<16x1xi32>
    %7 = arith.cmpi slt, %5, %6 : vector<16x1xi32>
    %c-100_i32 = arith.constant -100 : i32
    %8 = vector.broadcast %c-100_i32 : i32 to vector<16x1xi32>
    %9 = arith.cmpi ne, %1, %8 : vector<16x1xi32>
    %10 = arith.andi %7, %9 : vector<16x1xi1>
    %cst = arith.constant dense<0xFF800000> : vector<16xf32>
    %11 = vector.multi_reduction <maximumf>, %0, %cst [1] : vector<16x32xf32> to vector<16xf32>
    %12 = vector.shape_cast %11 : vector<16xf32> to vector<16x1xf32>
    %13 = vector.broadcast %12 : vector<16x1xf32> to vector<16x32xf32>
    %14 = arith.subf %0, %13 : vector<16x32xf32>
    %15 = math.exp %14 : vector<16x32xf32>
    %cst_4 = arith.constant dense<0.000000e+00> : vector<16xf32>
    %16 = vector.multi_reduction <add>, %15, %cst_4 [1] : vector<16x32xf32> to vector<16xf32>
    %17 = vector.shape_cast %16 : vector<16xf32> to vector<16x1xf32>
    %18 = math.log %17 : vector<16x1xf32>
    %19 = tpu.iota {dimensions = array<i32: 1>} : vector<16x32xi32>
    %20 = vector.broadcast %1 : vector<16x1xi32> to vector<16x32xi32>
    %21 = arith.cmpi eq, %19, %20 : vector<16x32xi32>
    %cst_5 = arith.constant 0.000000e+00 : f32
    %22 = vector.broadcast %cst_5 : f32 to vector<16x32xf32>
    %23 = arith.select %21, %14, %22 : vector<16x32xi1>, vector<16x32xf32>
    %cst_6 = arith.constant dense<0.000000e+00> : vector<16xf32>
    %24 = vector.multi_reduction <add>, %23, %cst_6 [1] : vector<16x32xf32> to vector<16xf32>
    %25 = vector.shape_cast %24 : vector<16xf32> to vector<16x1xf32>
    %26 = arith.subf %18, %25 : vector<16x1xf32>
    %cst_7 = arith.constant 0.000000e+00 : f32
    %27 = vector.broadcast %cst_7 : f32 to vector<16x1xf32>
    %28 = arith.select %10, %26, %27 : vector<16x1xi1>, vector<16x1xf32>
    %29 = vector.shape_cast %28 : vector<16x1xf32> to vector<1x16x1xf32>
    %cst_8 = arith.constant dense<0.000000e+00> : vector<1xf32>
    %30 = vector.multi_reduction <add>, %29, %cst_8 [1, 2] : vector<1x16x1xf32> to vector<1xf32>
    %31 = vector.shape_cast %30 : vector<1xf32> to vector<1x1x1xf32>
    %32 = vector.extract %31[0, 0, 0] : f32 from vector<1x1x1xf32>
    %33 = vector.broadcast %32 : f32 to vector<1x1x1xf32>
    %c0_9 = arith.constant 0 : index
    %c0_10 = arith.constant 0 : index
    %c0_11 = arith.constant 0 : index
    %34 = vector.load %arg3[%c0_9, %c0_10, %c0_11] : memref<1x1x1xf32, #tpu.memory_space<vmem>>, vector<1x1x1xf32>
    tpu.vector_store %arg3[%c0_9, %c0_10, %c0_11], %33 {strides = array<i32>} : memref<1x1x1xf32, #tpu.memory_space<vmem>>, vector<1x1x1xf32>,
    return
  }
  func.func @transform_0(%arg0: i32) -> (i32, i32) {
    %c0_i32 = arith.constant 0 : i32
    %c0_i32_0 = arith.constant 0 : i32
    return %arg0, %c0_i32 : i32, i32
  }
  func.func @transform_1(%arg0: i32) -> (i32, i32) {
    %c0_i32 = arith.constant 0 : i32
    %c0_i32_0 = arith.constant 0 : i32
    return %arg0, %c0_i32 : i32, i32
  }
  func.func @transform_2(%arg0: i32) -> (i32, i32, i32) {
    %c0_i32 = arith.constant 0 : i32
    %c0_i32_0 = arith.constant 0 : i32
    %c0_i32_1 = arith.constant 0 : i32
    return %arg0, %c0_i32, %c0_i32_0 : i32, i32, i32
  }
}

</mosaic_0001>

<llo_original>
// kernel: tpu_custom_call.1
$region0: #{tpu_custom_call.1}
  #allocation0 [shape = 'u32[]', space=smem, size = 0x4, offset = 0x4, fixed_abs, tag = 'smem constant byte address 0x4 - core index']
  #allocation1 [shape = 'u32[72,128]{1,0:T(1,128)}', space=vmem, size = 0x9000, scoped, tag = 'internal scratch']
  %s0 = inlined_call_operand.vmem [shape: f32[16,32], index: 0, kind: input, shape index: {}]
  %s1 = inlined_call_operand.vmem [shape: s32[16,1], index: 1, kind: input, shape index: {}]
  %s2 = inlined_call_operand.hbm [shape: f32[1,1,1], index: 2, kind: output, shape index: {}]
  %s3 = sld [smem:[#allocation0]]
  $region18: #{tpu_custom_call.1} parent=0
    _
  %s5 = ssub.s32 1, %s3
  %s6 = scalar_select 0, %s5, %s3
  $region1: #{tpu_custom_call.1} parent=0
    #allocation2 [shape = 'u8[512]{0}', space=vmem, size = 0x400, scoped, tag = 'output window, operand 0, single buffered']
    #allocation3 [shape = 's32[1]{0}', space=sflag, size = 0x4, scoped, tag = 'scoped memory for tpu_custom_call.1']
    %7 = vsyncpa [#allocation3], 0
    // Predicated region
    $region2: #{tpu_custom_call.1} parent=1 // pred_check
      _
    $region3: #{tpu_custom_call.1} parent=1 // pred_check_branch
      %9 = sbr.rel (0) target = $region5
    $region4: #{tpu_custom_call.1} parent=1 // pred_region
      _
    $region5: #{tpu_custom_call.1} parent=1 // pred_fallthru
      _
    // Predicated region
    $region6: #{tpu_custom_call.1} parent=1 // pred_check
      _
    $region7: #{tpu_custom_call.1} parent=1 // pred_check_branch
      %11 = sbr.rel (0) target = $region9
    $region8: #{tpu_custom_call.1} parent=1 // pred_region
      _
    $region9: #{tpu_custom_call.1} parent=1 // pred_fallthru
      _
    %v12 = vld [vmem:[%s0] sm:$0xff]
    %v13 = vld [vmem:[%s0 + $0x8] sm:$0xff]
    %v14 = vld [vmem:[%s1] sm:$0xff]
    %v15 = vld [vmem:[%s1 + $0x8] sm:$0xff]
    %v16 = vlaneseq
    %v17 = vshrl.u32 %v16, 7
    %v18 = vadd.s32 %v17, 8
    %s19 = smul.u32 0, 16
    %v20 = vstv %s19
    %v21 = vadd.s32 %v17, %v20
    %v22 = vadd.s32 %v18, %v20
    %vm23 = vcmp.lt.s32.totalorder %v21, 16
    %vm24 = vcmp.lt.s32.totalorder %v22, 16
    %vm25 = vcmp.ne.s32.totalorder %v14, 4294967196
    %vm26 = vcmp.ne.s32.totalorder %v15, 4294967196
    %vm27 = vmand %vm23, %vm25
    %vm28 = vmand %vm24, %vm26
    %vm29 = vcmask 261120
    %v30 = vsel %vm29, %v12, -inf
    %31 = vmax.xlane.f32.xlu0 %v30
    %v32 = vpop.xlane.xlu0 %31
    %v33 = vsel %vm29, %v13, -inf
    %34 = vmax.xlane.f32.xlu0 %v33
    %v35 = vpop.xlane.xlu0 %34
    %v36 = vsub.f32 %v12, %v32
    %v37 = vsub.f32 %v13, %v35
    %v38 = vmul.f32 %v36, 1.442695
    %v39 = vpow.pop %v38
    %v40 = vmul.f32 %v37, 1.442695
    %v41 = vpow.pop %v40
    %v42 = vsel %vm29, %v39, 0.0
    %43 = vadd.xlane.f32.xlu0 %v42
    %v44 = vpop.xlane.xlu0 %43
    %v45 = vsel %vm29, %v41, 0.0
    %46 = vadd.xlane.f32.xlu0 %v45
    %v47 = vpop.xlane.xlu0 %46
    %v48 = vlog2.pop %v44
    %v49 = vmul.f32 %v48, 0.6931472
    %v50 = vlog2.pop %v47
    %v51 = vmul.f32 %v50, 0.6931472
    %v52 = vlaneseq
    %v53 = vand.u32 %v52, 127
    %54 = vset.pattern.permute.xlu0 0
    %55 = vperm.xlu0 %54, %v14
    %v56 = vpop.permute.xlu0 %55
    %57 = vset.pattern.permute.xlu0 0
    %58 = vperm.xlu0 %57, %v15
    %v59 = vpop.permute.xlu0 %58
    %vm60 = vcmp.eq.s32.totalorder %v53, %v56
    %vm61 = vcmp.eq.s32.totalorder %v53, %v59
    %v62 = vsel %vm60, %v36, 0.0
    %v63 = vsel %vm61, %v37, 0.0
    %v64 = vsel %vm29, %v62, 0.0
    %65 = vadd.xlane.f32.xlu0 %v64
    %v66 = vpop.xlane.xlu0 %65
    %v67 = vsel %vm29, %v63, 0.0
    %68 = vadd.xlane.f32.xlu0 %v67
    %v69 = vpop.xlane.xlu0 %68
    %v70 = vsub.f32 %v49, %v66
    %v71 = vsub.f32 %v51, %v69
    %v72 = vsel %vm27, %v70, 0.0
    %v73 = vsel %vm28, %v71, 0.0
    %vm74 = vcmask 7168
    %v75 = vsel %vm74, %v72, 0.0
    %v76 = vsel %vm74, %v73, 0.0
    %v77 = vadd.f32 %v75, %v76
    %78 = vadd.xlane.f32.xlu0 %v77
    %v79 = vpop.xlane.xlu0 %78
    %v80 = vrot.slane %v79, 4
    %v81 = vadd.f32 %v79, %v80
    %v82 = vrot.slane %v81, 2
    %v83 = vadd.f32 %v81, %v82
    %v84 = vrot.slane %v83, 1
    %v85 = vadd.f32 %v83, %v84
    %s86 = vtos %v85
    %v87 = vstv %s86
    %vm88 = vcmask 0
    %89 = vst.msk [vmem:[#allocation2] sm:$0x1] %vm88, %v87
    // Predicated region
    $region10: #{tpu_custom_call.1} parent=1 // pred_check
      _
    $region11: #{tpu_custom_call.1} parent=1 // pred_check_branch
      %91 = sbr.rel (0) target = $region13
    $region12: #{tpu_custom_call.1} parent=1 // pred_region
      %93 = vsyncadd [#allocation3], 0
      %s95 = sshll.u32 [#allocation2], 4
      %s96 = int_to_ptr.vmem [resolvable:$true] %s95
      %s97 = sshll.u32 %s2, 4
      %s98 = int_to_ptr.hbm [resolvable:$true] %s97
      %100 = dma.vmem_to_hbm [thread:$0]  %s96, 16, %s98, [#allocation3]
    $region13: #{tpu_custom_call.1} parent=1 // pred_fallthru
      _
    // Predicated region
    $region14: #{tpu_custom_call.1} parent=1 // pred_check
      _
    $region15: #{tpu_custom_call.1} parent=1 // pred_check_branch
      %102 = sbr.rel (0) target = $region17
    $region16: #{tpu_custom_call.1} parent=1 // pred_region
      %104 = dma.done [#allocation3], 16
    $region17: #{tpu_custom_call.1} parent=1 // pred_fallthru
      _
    %105 = vsyncpa [#allocation3], 1

</llo_original>
